<compile_context>
chip_gen: v5e
topology: v5e:2x2
jax: 0.10.0
libtpu: 0.0.40
codegen_flags: <defaults>
</compile_context>

<pallas_src>
import jax
import jax.numpy as jnp
from jax.experimental import pallas as pl
from jax.experimental.pallas import tpu as pltpu


def fused_two_pixel_conv_diff_kernel(p_ref, o_ref):
    # p_ref: (1, 2*n) packed as
    #   lhs = [x17(Cin), 1, x42(Cin), 1]
    #   rhs = [w0(Cin),  b0, -w1(Cin), -b1]
    # so sum(lhs * rhs) = (w0.x17 + b0) - (w1.x42 + b1) = v5.
    n = p_ref.shape[1] // 2
    lhs = p_ref[:, 0:n]
    rhs = p_ref[:, n:2 * n]
    o_ref[...] = jnp.sum(lhs * rhs, axis=1, keepdims=True)


@jax.jit
def model_forward(x, weight, bias):
    """Equivalent of Model.forward: conv1x1(x) then v1[17,0,0,0] - v1[42,1,0,0]."""
    Cout, Cin = weight.shape[0], weight.shape[1]
    # 1x1 conv assumption (holds for this module); reshape weight to (Cout, Cin).
    assert weight.shape[2] == 1 and weight.shape[3] == 1, "kernel_size must be 1"
    w_mat = weight.reshape(Cout, Cin).astype(jnp.float32)
    xf = x.astype(jnp.float32)
    bf = bias.astype(jnp.float32)

    one = jnp.ones((1,), jnp.float32)
    # lhs / rhs each have length 2*(Cin+1); packed buffer is (1, 4*(Cin+1)).
    lhs = jnp.concatenate([xf[17, :, 0, 0], one, xf[42, :, 0, 0], one])
    rhs = jnp.concatenate([w_mat[0, :], bf[0:1], -w_mat[1, :], -bf[1:2]])
    packed = jnp.concatenate([lhs, rhs]).reshape(1, 4 * (Cin + 1))

    out = pl.pallas_call(
        fused_two_pixel_conv_diff_kernel,
        out_shape=jax.ShapeDtypeStruct((1, 1), jnp.float32),
        in_specs=[pl.BlockSpec(memory_space=pltpu.MemorySpace.VMEM)],
        out_specs=pl.BlockSpec(memory_space=pltpu.MemorySpace.VMEM),
        cost_estimate=pl.CostEstimate(
            flops=16, transcendentals=0, bytes_accessed=4 * (4 * (Cin + 1) + 1)
        ),
    )(packed)
    return out[0, 0]


if __name__ == "__main__":
    # The forward indexes batch entries 17 and 42, so batch must be >= 43;
    # spatial dims kept small (8x8), channels per the module (3 -> 5).
    N, Cin, H, W = 48, 3, 8, 8
    Cout = 5

    key = jax.random.PRNGKey(0)
    kx, kw, kb = jax.random.split(key, 3)

    x = jax.random.normal(kx, (N, Cin, H, W), dtype=jnp.float32)
    # Deterministic parameters matching Conv2d(3, 5, 1) parameter shapes.
    weight = jax.random.normal(kw, (Cout, Cin, 1, 1), dtype=jnp.float32) * 0.1
    bias = jax.random.normal(kb, (Cout,), dtype=jnp.float32) * 0.1

    out = jax.block_until_ready(model_forward(x, weight, bias))

    # Pure-JAX reference of the full module semantics (full 1x1 conv, then
    # the two-element slice and subtraction).
    v1_ref = (
        jnp.einsum("nchw,oc->nohw", x, weight.reshape(Cout, Cin))
        + bias[None, :, None, None]
    )
    ref = v1_ref[17, 0, 0, 0] - v1_ref[42, 1, 0, 0]
    assert jnp.allclose(out, ref, atol=1e-5, rtol=1e-5), (out, ref)

    print("KERNEL_OK")
</pallas_src>

<mosaic_0001>
module attributes {stable_mosaic.version = 11 : i64} {
  func.func @fused_two_pixel_conv_diff_kernel(%arg0: memref<1x16xf32, #tpu.memory_space<vmem>>, %arg1: memref<1x1xf32, #tpu.memory_space<vmem>>) attributes {dimension_semantics = [], scalar_prefetch = 0 : i64, scratch_operands = 0 : i64, tpu.core_type = #tpu.core_type<tc>} {
    %c0 = arith.constant 0 : index
    %c0_0 = arith.constant 0 : index
    %0 = vector.load %arg0[%c0, %c0_0] : memref<1x16xf32, #tpu.memory_space<vmem>>, vector<1x8xf32>
    %c0_1 = arith.constant 0 : index
    %c8 = arith.constant 8 : index
    %1 = vector.load %arg0[%c0_1, %c8] : memref<1x16xf32, #tpu.memory_space<vmem>>, vector<1x8xf32>
    %2 = arith.mulf %0, %1 : vector<1x8xf32>
    %cst = arith.constant dense<0.000000e+00> : vector<1xf32>
    %3 = vector.multi_reduction <add>, %2, %cst [1] : vector<1x8xf32> to vector<1xf32>
    %4 = vector.shape_cast %3 : vector<1xf32> to vector<1x1xf32>
    %c0_2 = arith.constant 0 : index
    %c0_3 = arith.constant 0 : index
    %5 = vector.load %arg1[%c0_2, %c0_3] : memref<1x1xf32, #tpu.memory_space<vmem>>, vector<1x1xf32>
    tpu.vector_store %arg1[%c0_2, %c0_3], %4 {strides = array<i32>} : memref<1x1xf32, #tpu.memory_space<vmem>>, vector<1x1xf32>,
    return
  }
}

</mosaic_0001>

<llo_original>
// kernel: model_forward.1
$region0: #{model_forward.1}
  #allocation0 [shape = 'u32[]', space=smem, size = 0x4, offset = 0x4, fixed_abs, tag = 'smem constant byte address 0x4 - core index']
  #allocation1 [shape = 'u32[72,128]{1,0:T(1,128)}', space=vmem, size = 0x9000, scoped, tag = 'internal scratch']
  %s0 = inlined_call_operand.vmem [shape: f32[1,16], index: 0, kind: input, shape index: {}]
  %s1 = inlined_call_operand.hbm [shape: f32[1,1], index: 1, kind: output, shape index: {}]
  %s2 = sld [smem:[#allocation0]]
  $region14: #{model_forward.1} parent=0
    _
  %s4 = ssub.s32 1, %s2
  %s5 = scalar_select 0, %s4, %s2
  $region1: #{model_forward.1} parent=0
    #allocation2 [shape = 'u8[512]{0}', space=vmem, size = 0x400, scoped, tag = 'output window, operand 0, single buffered']
    #allocation3 [shape = 's32[1]{0}', space=sflag, size = 0x4, scoped, tag = 'scoped memory for model_forward.1']
    %6 = vsyncpa [#allocation3], 0
    // Predicated region
    $region2: #{model_forward.1} parent=1 // pred_check
      _
    $region3: #{model_forward.1} parent=1 // pred_check_branch
      %8 = sbr.rel (0) target = $region5
    $region4: #{model_forward.1} parent=1 // pred_region
      _
    $region5: #{model_forward.1} parent=1 // pred_fallthru
      _
    %v9 = vld [vmem:[%s0] sm:$0x1]
    %11 = vrot.lane.b32.xlu0 %v9, 120
    %v12 = vpop.permute.xlu0 %11
    %v14 = vmul.f32 %v9, %v12
    %vm15 = vcmask 57344
    %v16 = vsel %vm15, %v14, 0.0
    %17 = vadd.xlane.f32.xlu0 %v16
    %v18 = vpop.xlane.xlu0 %17
    %vm19 = vcmask 0
    %20 = vst.msk [vmem:[#allocation2] sm:$0x1] %vm19, %v18
    // Predicated region
    $region6: #{model_forward.1} parent=1 // pred_check
      _
    $region7: #{model_forward.1} parent=1 // pred_check_branch
      %22 = sbr.rel (0) target = $region9
    $region8: #{model_forward.1} parent=1 // pred_region
      %24 = vsyncadd [#allocation3], 0
      %s26 = sshll.u32 [#allocation2], 4
      %s27 = int_to_ptr.vmem [resolvable:$true] %s26
      %s28 = sshll.u32 %s1, 4
      %s29 = int_to_ptr.hbm [resolvable:$true] %s28
      %31 = dma.vmem_to_hbm [thread:$0]  %s27, 16, %s29, [#allocation3]
    $region9: #{model_forward.1} parent=1 // pred_fallthru
      _
    // Predicated region
    $region10: #{model_forward.1} parent=1 // pred_check
      _
    $region11: #{model_forward.1} parent=1 // pred_check_branch
      %33 = sbr.rel (0) target = $region13
    $region12: #{model_forward.1} parent=1 // pred_region
      %35 = dma.done [#allocation3], 16
    $region13: #{model_forward.1} parent=1 // pred_fallthru
      _
    %36 = vsyncpa [#allocation3], 1

</llo_original>
